<compile_context>
chip_gen: v5e
topology: v5e:2x2
jax: 0.10.0
libtpu: 0.0.40
codegen_flags: <defaults>
</compile_context>

<pallas_src>
import functools

import jax
import jax.numpy as jnp
from jax.experimental import pallas as pl
from jax.experimental.pallas import tpu as pltpu

# ----- packed parameter slab layout (rows 8-aligned, 128 lanes wide) ---------
SLAB_ROWS = 136          # 32 (l1) + 64 (l2) + 32 (l3) + 8 (critic_l1)
SLAB_COLS = 128
R1, R2, R3, R4 = 0, 32, 96, 128          # row offset of each layer block
BC1, BC2, BC3, BC4 = 8, 32, 64, 32       # lane column holding that layer's bias


def qac_critic_kernel(slab_ref, inv_ref, x_ref, out_ref):
    # x tile: (8, TB) f32 — 4 real feature rows + 4 zero rows, batch on lanes.
    x = x_ref[...]
    inv = inv_ref[...]                       # (8, 1): 1 / max(||col||, 1e-12)
    xn = x * inv                             # F.normalize(x, dim=0)

    # ---- l1: 4 -> 25 (padded 32), ReLU.  K=4 -> 4 VPU broadcast FMAs, no MXU.
    w1 = slab_ref[R1:R1 + 32, 0:4]           # (32, 4)
    y = slab_ref[R1:R1 + 32, BC1:BC1 + 1]    # b1 (32, 1)
    for k in range(4):
        y = y + w1[:, k:k + 1] * xn[k:k + 1, :]
    y = jnp.maximum(y, 0.0)                  # (32, TB)

    # ---- l2: 25 -> 50 (padded 32 -> 64), ReLU.  MXU, aligned shapes.
    w2 = slab_ref[R2:R2 + 64, 0:32]
    b2 = slab_ref[R2:R2 + 64, BC2:BC2 + 1]
    y = jnp.maximum(
        jnp.dot(w2, y, preferred_element_type=jnp.float32) + b2, 0.0)   # (64, TB)

    # ---- l3: 50 -> 25 (padded 64 -> 32), ReLU.  MXU.
    w3 = slab_ref[R3:R3 + 32, 0:64]
    b3 = slab_ref[R3:R3 + 32, BC3:BC3 + 1]
    y = jnp.maximum(
        jnp.dot(w3, y, preferred_element_type=jnp.float32) + b3, 0.0)   # (32, TB)

    # ---- critic_l1: 25 -> 2 (padded 32 -> 8), tanh.
    w4 = slab_ref[R4:R4 + 8, 0:32]
    b4 = slab_ref[R4:R4 + 8, BC4:BC4 + 1]
    c = jnp.dot(w4, y, preferred_element_type=jnp.float32) + b4          # (8, TB)
    out_ref[...] = jnp.tanh(c[0:2, :])       # lane-dense (2, TB) store


def pack_params(params):
    """Pack torch-layout (out, in) weights and (out,) biases into one zero-padded
    (136, 128) f32 slab. Zero padding is exact: padded output rows stay 0 through
    ReLU and padded weight columns contribute 0 downstream."""
    w1, b1, w2, b2, w3, b3, w4, b4 = params
    slab = jnp.zeros((SLAB_ROWS, SLAB_COLS), jnp.float32)
    slab = slab.at[R1:R1 + 25, 0:4].set(w1).at[R1:R1 + 25, BC1].set(b1)
    slab = slab.at[R2:R2 + 50, 0:25].set(w2).at[R2:R2 + 50, BC2].set(b2)
    slab = slab.at[R3:R3 + 25, 0:50].set(w3).at[R3:R3 + 25, BC3].set(b3)
    slab = slab.at[R4:R4 + 2, 0:25].set(w4).at[R4:R4 + 2, BC4].set(b4)
    return slab


@functools.partial(jax.jit, static_argnames=("block_b",))
def qac_critic_forward(x, param_slab, *, block_b=128):
    """x: (B, 4) f32 (PyTorch row convention). Returns (B, 2)."""
    B = x.shape[0]
    x = x.astype(jnp.float32)

    # Hoisted full-batch per-feature inverse L2 norm (normalize(dim=0) couples
    # all rows). rsqrt(max(sumsq, eps^2)) == 1 / max(||col||, eps), eps=1e-12.
    sumsq = jnp.sum(x * x, axis=0)                           # (4,)
    inv = jax.lax.rsqrt(jnp.maximum(sumsq, 1e-24))           # (4,)
    inv8 = jnp.zeros((8, 1), jnp.float32).at[0:4, 0].set(inv)

    # Transpose so batch maps to lanes; pad feats -> 8 sublanes, batch -> tile.
    b_pad = ((B + block_b - 1) // block_b) * block_b
    x_t = jnp.zeros((8, b_pad), jnp.float32).at[0:4, 0:B].set(x.T)

    out_t = pl.pallas_call(
        qac_critic_kernel,
        out_shape=jax.ShapeDtypeStruct((2, b_pad), jnp.float32),
        grid_spec=pltpu.PrefetchScalarGridSpec(
            num_scalar_prefetch=0,
            grid=(b_pad // block_b,),
            in_specs=[
                pl.BlockSpec((SLAB_ROWS, SLAB_COLS), lambda i: (0, 0)),  # resident params
                pl.BlockSpec((8, 1), lambda i: (0, 0)),                  # resident inv-norm
                pl.BlockSpec((8, block_b), lambda i: (0, i)),            # batch tile
            ],
            out_specs=pl.BlockSpec((2, block_b), lambda i: (0, i)),
        ),
        compiler_params=pltpu.CompilerParams(
            dimension_semantics=("parallel",)),
    )(param_slab, inv8, x_t)

    return out_t[:, :B].T    # back to (B, 2), PyTorch convention


def init_params(key):
    """torch.nn.Linear default init: U(-1/sqrt(fan_in), 1/sqrt(fan_in)),
    weights in torch-native (out_features, in_features) layout."""
    sizes = [(25, 4), (50, 25), (25, 50), (2, 25)]
    params = []
    for (fan_out, fan_in) in sizes:
        key, kw, kb = jax.random.split(key, 3)
        bound = 1.0 / (fan_in ** 0.5)
        w = jax.random.uniform(kw, (fan_out, fan_in), jnp.float32, -bound, bound)
        b = jax.random.uniform(kb, (fan_out,), jnp.float32, -bound, bound)
        params.extend([w, b])
    return tuple(params)


def reference_forward(x, params):
    """Pure-JAX reference of the PyTorch forward (exact f32 matmuls)."""
    w1, b1, w2, b2, w3, b3, w4, b4 = params
    hp = jax.lax.Precision.HIGHEST
    norm = jnp.maximum(jnp.linalg.norm(x, axis=0, keepdims=True), 1e-12)
    xn = x / norm
    y = jax.nn.relu(jnp.dot(xn, w1.T, precision=hp) + b1)
    y = jax.nn.relu(jnp.dot(y, w2.T, precision=hp) + b2)
    c = jax.nn.relu(jnp.dot(y, w3.T, precision=hp) + b3)
    return jnp.tanh(jnp.dot(c, w4.T, precision=hp) + b4)


if __name__ == "__main__":
    key = jax.random.PRNGKey(0)
    key, kx = jax.random.split(key)

    batch = 200   # small; exercises batch padding (200 -> 256) and a 2-step grid
    x = jax.random.normal(kx, (batch, 4), jnp.float32)   # CartPole state: 4 features
    params = init_params(key)
    slab = pack_params(params)   # pack once; reusable across forward calls

    out = qac_critic_forward(x, slab)
    out = jax.block_until_ready(out)

    ref = reference_forward(x, params)
    assert out.shape == (batch, 2)
    err = float(jnp.max(jnp.abs(out - ref)))
    assert err < 1e-4, f"mismatch vs reference: max abs err = {err}"

    print("KERNEL_OK")
</pallas_src>

<mosaic_0001>
module attributes {stable_mosaic.version = 11 : i64} {
  func.func @qac_critic_kernel(%arg0: i32, %arg1: memref<136x128xf32, #tpu.memory_space<vmem>>, %arg2: memref<8x1xf32, #tpu.memory_space<vmem>>, %arg3: memref<8x128xf32, #tpu.memory_space<vmem>>, %arg4: memref<2x128xf32, #tpu.memory_space<vmem>>) attributes {dimension_semantics = [#tpu.dimension_semantics<parallel>], iteration_bounds = array<i64: 2>, scalar_prefetch = 0 : i64, scratch_operands = 0 : i64, tpu.core_type = #tpu.core_type<tc>, window_params = [{pipeline_mode = #tpu.pipeline_mode<synchronous>, transform_indices = @transform_0, window_bounds = array<i64: 136, 128>}, {pipeline_mode = #tpu.pipeline_mode<synchronous>, transform_indices = @transform_1, window_bounds = array<i64: 8, 1>}, {transform_indices = @transform_2, window_bounds = array<i64: 8, 128>}, {transform_indices = @transform_3, window_bounds = array<i64: 2, 128>}]} {
    %c0 = arith.constant 0 : index
    %c0_0 = arith.constant 0 : index
    %0 = vector.load %arg3[%c0, %c0_0] : memref<8x128xf32, #tpu.memory_space<vmem>>, vector<8x128xf32>
    %c0_1 = arith.constant 0 : index
    %c0_2 = arith.constant 0 : index
    %1 = vector.load %arg2[%c0_1, %c0_2] : memref<8x1xf32, #tpu.memory_space<vmem>>, vector<8x1xf32>
    %2 = vector.broadcast %1 : vector<8x1xf32> to vector<8x128xf32>
    %3 = arith.mulf %0, %2 : vector<8x128xf32>
    %c0_3 = arith.constant 0 : index
    %c0_4 = arith.constant 0 : index
    %4 = vector.load %arg1[%c0_3, %c0_4] : memref<136x128xf32, #tpu.memory_space<vmem>>, vector<32x4xf32>
    %c0_5 = arith.constant 0 : index
    %c8 = arith.constant 8 : index
    %5 = vector.load %arg1[%c0_5, %c8] : memref<136x128xf32, #tpu.memory_space<vmem>>, vector<32x1xf32>
    %6 = vector.extract_strided_slice %4 {offsets = [0, 0], sizes = [32, 1], strides = [1, 1]} : vector<32x4xf32> to vector<32x1xf32>
    %7 = vector.extract_strided_slice %3 {offsets = [0, 0], sizes = [1, 128], strides = [1, 1]} : vector<8x128xf32> to vector<1x128xf32>
    %8 = vector.broadcast %6 : vector<32x1xf32> to vector<32x128xf32>
    %9 = vector.broadcast %7 : vector<1x128xf32> to vector<32x128xf32>
    %10 = arith.mulf %8, %9 : vector<32x128xf32>
    %11 = vector.broadcast %5 : vector<32x1xf32> to vector<32x128xf32>
    %12 = arith.addf %11, %10 : vector<32x128xf32>
    %13 = vector.extract_strided_slice %4 {offsets = [0, 1], sizes = [32, 1], strides = [1, 1]} : vector<32x4xf32> to vector<32x1xf32>
    %14 = vector.extract_strided_slice %3 {offsets = [1, 0], sizes = [1, 128], strides = [1, 1]} : vector<8x128xf32> to vector<1x128xf32>
    %15 = vector.broadcast %13 : vector<32x1xf32> to vector<32x128xf32>
    %16 = vector.broadcast %14 : vector<1x128xf32> to vector<32x128xf32>
    %17 = arith.mulf %15, %16 : vector<32x128xf32>
    %18 = arith.addf %12, %17 : vector<32x128xf32>
    %19 = vector.extract_strided_slice %4 {offsets = [0, 2], sizes = [32, 1], strides = [1, 1]} : vector<32x4xf32> to vector<32x1xf32>
    %20 = vector.extract_strided_slice %3 {offsets = [2, 0], sizes = [1, 128], strides = [1, 1]} : vector<8x128xf32> to vector<1x128xf32>
    %21 = vector.broadcast %19 : vector<32x1xf32> to vector<32x128xf32>
    %22 = vector.broadcast %20 : vector<1x128xf32> to vector<32x128xf32>
    %23 = arith.mulf %21, %22 : vector<32x128xf32>
    %24 = arith.addf %18, %23 : vector<32x128xf32>
    %25 = vector.extract_strided_slice %4 {offsets = [0, 3], sizes = [32, 1], strides = [1, 1]} : vector<32x4xf32> to vector<32x1xf32>
    %26 = vector.extract_strided_slice %3 {offsets = [3, 0], sizes = [1, 128], strides = [1, 1]} : vector<8x128xf32> to vector<1x128xf32>
    %27 = vector.broadcast %25 : vector<32x1xf32> to vector<32x128xf32>
    %28 = vector.broadcast %26 : vector<1x128xf32> to vector<32x128xf32>
    %29 = arith.mulf %27, %28 : vector<32x128xf32>
    %30 = arith.addf %24, %29 : vector<32x128xf32>
    %cst = arith.constant 0.000000e+00 : f32
    %31 = vector.broadcast %cst : f32 to vector<32x128xf32>
    %32 = arith.maximumf %30, %31 : vector<32x128xf32>
    %c32 = arith.constant 32 : index
    %c0_6 = arith.constant 0 : index
    %33 = vector.load %arg1[%c32, %c0_6] : memref<136x128xf32, #tpu.memory_space<vmem>>, vector<64x32xf32>
    %c32_7 = arith.constant 32 : index
    %c32_8 = arith.constant 32 : index
    %34 = vector.load %arg1[%c32_7, %c32_8] : memref<136x128xf32, #tpu.memory_space<vmem>>, vector<64x1xf32>
    %cst_9 = arith.constant dense<0.000000e+00> : vector<64x128xf32>
    %35 = tpu.matmul %33, %32, %cst_9 {dimension_numbers = #tpu.dot_dimension_numbers<[1], [0], [0], [1], [0, 0, 1, 1], [], []>} : vector<64x32xf32>, vector<32x128xf32>, vector<64x128xf32> -> vector<64x128xf32>
    %36 = vector.broadcast %34 : vector<64x1xf32> to vector<64x128xf32>
    %37 = arith.addf %35, %36 : vector<64x128xf32>
    %cst_10 = arith.constant 0.000000e+00 : f32
    %38 = vector.broadcast %cst_10 : f32 to vector<64x128xf32>
    %39 = arith.maximumf %37, %38 : vector<64x128xf32>
    %c96 = arith.constant 96 : index
    %c0_11 = arith.constant 0 : index
    %40 = vector.load %arg1[%c96, %c0_11] : memref<136x128xf32, #tpu.memory_space<vmem>>, vector<32x64xf32>
    %c96_12 = arith.constant 96 : index
    %c64 = arith.constant 64 : index
    %41 = vector.load %arg1[%c96_12, %c64] : memref<136x128xf32, #tpu.memory_space<vmem>>, vector<32x1xf32>
    %cst_13 = arith.constant dense<0.000000e+00> : vector<32x128xf32>
    %42 = tpu.matmul %40, %39, %cst_13 {dimension_numbers = #tpu.dot_dimension_numbers<[1], [0], [0], [1], [0, 0, 1, 1], [], []>} : vector<32x64xf32>, vector<64x128xf32>, vector<32x128xf32> -> vector<32x128xf32>
    %43 = vector.broadcast %41 : vector<32x1xf32> to vector<32x128xf32>
    %44 = arith.addf %42, %43 : vector<32x128xf32>
    %cst_14 = arith.constant 0.000000e+00 : f32
    %45 = vector.broadcast %cst_14 : f32 to vector<32x128xf32>
    %46 = arith.maximumf %44, %45 : vector<32x128xf32>
    %c128 = arith.constant 128 : index
    %c0_15 = arith.constant 0 : index
    %47 = vector.load %arg1[%c128, %c0_15] : memref<136x128xf32, #tpu.memory_space<vmem>>, vector<8x32xf32>
    %c128_16 = arith.constant 128 : index
    %c32_17 = arith.constant 32 : index
    %48 = vector.load %arg1[%c128_16, %c32_17] : memref<136x128xf32, #tpu.memory_space<vmem>>, vector<8x1xf32>
    %cst_18 = arith.constant dense<0.000000e+00> : vector<8x128xf32>
    %49 = tpu.matmul %47, %46, %cst_18 {dimension_numbers = #tpu.dot_dimension_numbers<[1], [0], [0], [1], [0, 0, 1, 1], [], []>} : vector<8x32xf32>, vector<32x128xf32>, vector<8x128xf32> -> vector<8x128xf32>
    %50 = vector.broadcast %48 : vector<8x1xf32> to vector<8x128xf32>
    %51 = arith.addf %49, %50 : vector<8x128xf32>
    %52 = vector.extract_strided_slice %51 {offsets = [0, 0], sizes = [2, 128], strides = [1, 1]} : vector<8x128xf32> to vector<2x128xf32>
    %53 = math.tanh %52 : vector<2x128xf32>
    %c0_19 = arith.constant 0 : index
    %c0_20 = arith.constant 0 : index
    %54 = vector.load %arg4[%c0_19, %c0_20] : memref<2x128xf32, #tpu.memory_space<vmem>>, vector<2x128xf32>
    tpu.vector_store %arg4[%c0_19, %c0_20], %53 {strides = array<i32>} : memref<2x128xf32, #tpu.memory_space<vmem>>, vector<2x128xf32>,
    return
  }
  func.func @transform_0(%arg0: i32) -> (i32, i32) {
    %c0_i32 = arith.constant 0 : i32
    %c0_i32_0 = arith.constant 0 : i32
    %c0_i32_1 = arith.constant 0 : i32
    return %c0_i32, %c0_i32_0 : i32, i32
  }
  func.func @transform_1(%arg0: i32) -> (i32, i32) {
    %c0_i32 = arith.constant 0 : i32
    %c0_i32_0 = arith.constant 0 : i32
    %c0_i32_1 = arith.constant 0 : i32
    return %c0_i32, %c0_i32_0 : i32, i32
  }
  func.func @transform_2(%arg0: i32) -> (i32, i32) {
    %c0_i32 = arith.constant 0 : i32
    %c0_i32_0 = arith.constant 0 : i32
    return %c0_i32, %arg0 : i32, i32
  }
  func.func @transform_3(%arg0: i32) -> (i32, i32) {
    %c0_i32 = arith.constant 0 : i32
    %c0_i32_0 = arith.constant 0 : i32
    return %c0_i32, %arg0 : i32, i32
  }
}

</mosaic_0001>

<llo_original>
// kernel: qac_critic_forward.1
$region0: #{qac_critic_forward.1}
  #allocation0 [shape = 'u32[]', space=smem, size = 0x4, offset = 0x4, fixed_abs, tag = 'smem constant byte address 0x4 - core index']
  #allocation1 [shape = 'u32[72,128]{1,0:T(1,128)}', space=vmem, size = 0x9000, scoped, tag = 'internal scratch']
  %s0 = inlined_call_operand.hbm [shape: f32[136,128], index: 0, kind: input, shape index: {}]
  %s1 = inlined_call_operand.vmem [shape: f32[8,1], index: 1, kind: input, shape index: {}]
  %s2 = inlined_call_operand.vmem [shape: f32[8,256], index: 2, kind: input, shape index: {}]
  %s3 = inlined_call_operand.vmem [shape: f32[2,256], index: 3, kind: output, shape index: {}]
  %s4 = sld [smem:[#allocation0]]
  $region49: #{qac_critic_forward.1} parent=0
    _
  %s6 = ssub.s32 1, %s4
  %s7 = scalar_select 0, %s6, %s4
  $region1: #{qac_critic_forward.1} parent=0
    #allocation2 [shape = 'u8[69632]{0}', space=vmem, size = 0x11000, scoped, tag = 'input window, operand 0, single buffered']
    #allocation3 [shape = 's32[2]{0}', space=sflag, size = 0x8, scoped, tag = 'scoped memory for qac_critic_forward.1']
    %8 = vsyncpa [#allocation3], 0
    loop: start=0, step=1, limit=4
    $region2: #{qac_critic_forward.1} parent=1 // loop_pre_header
      _
    $region3: #{qac_critic_forward.1} parent=1 // loop_header
      %s10 = sphi 0, %s14
      %p11 = scmp.ge.s32.totalorder %s10, 4
      %s18 = sphi 0, %s18
      %s20 = sphi 0, %s18
      %s21 = sphi 0, %s20
      %s35 = sphi 0, %s21
      %s39 = sphi 0, %s39
      %s41 = sphi 0, %s39
      %s42 = sphi 0, %s41
      %s56 = sphi 0, %s42
      %s62 = sphi 0, %s64
      %s65 = sphi 0, %s62
      %s66 = sphi 0, %s65
      %s82 = sphi 0, %s66
      %s88 = sphi 0, %s90
      %s91 = sphi 0, %s88
      %s92 = sphi 0, %s91
      %s108 = sphi 0, %s92
    $region4: #{qac_critic_forward.1} parent=1 // loop_header_branch
      %13 = sbr.rel (%p11) target = $region8
    $region5: #{qac_critic_forward.1} parent=1 // loop_body
      %s15 = ssub.s32 %s10, 1
      %s16 = ssub.s32 %s10, 2
      %s17 = sadd.s32 %s10, 1
      %s19 = sadd.s32 %s18, 1
      %p22 = scmp.eq.s32.totalorder %s10, 1
      %p23 = scmp.ne.s32.totalorder %s18, %s20
      %p24 = scmp.eq.s32.totalorder %s10, 0
      %p25 = por %p23, %p24
      %p26 = scmp.ne.s32.totalorder %s18, %s20
      %p27 = scmp.eq.s32.totalorder %s15, 1
      %p28 = por %p26, %p27
      %p29 = scmp.ne.s32.totalorder %s20, %s21
      %p30 = scmp.eq.s32.totalorder %s15, 0
      %p31 = por %p29, %p30
      %p32 = scmp.ne.s32.totalorder %s20, %s21
      %p33 = scmp.eq.s32.totalorder %s16, 1
      %p34 = por %p32, %p33
      %p36 = scmp.ne.s32.totalorder %s21, %s35
      %p37 = scmp.eq.s32.totalorder %s16, 0
      %p38 = por %p36, %p37
      %s40 = sadd.s32 %s39, 1
      %p43 = scmp.eq.s32.totalorder %s10, 1
      %p44 = scmp.ne.s32.totalorder %s39, %s41
      %p45 = scmp.eq.s32.totalorder %s10, 0
      %p46 = por %p44, %p45
      %p47 = scmp.ne.s32.totalorder %s39, %s41
      %p48 = scmp.eq.s32.totalorder %s15, 1
      %p49 = por %p47, %p48
      %p50 = scmp.ne.s32.totalorder %s41, %s42
      %p51 = scmp.eq.s32.totalorder %s15, 0
      %p52 = por %p50, %p51
      %p53 = scmp.ne.s32.totalorder %s41, %s42
      %p54 = scmp.eq.s32.totalorder %s16, 1
      %p55 = por %p53, %p54
      %p57 = scmp.ne.s32.totalorder %s42, %s56
      %p58 = scmp.eq.s32.totalorder %s16, 0
      %p59 = por %p57, %p58
      %s60 = ssub.s32 %s10, %s17
      %p61 = scmp.eq.s32.totalorder %s60, 0
      %s63 = sadd.s32 %s62, 1
      %s64 = scalar_select %p61, %s62, %s63
      %p67 = pneg %p61
      %p68 = scmp.eq.s32.totalorder %s10, 1
      %p69 = por %p67, %p68
      %p70 = scmp.ne.s32.totalorder %s62, %s65
      %p71 = scmp.eq.s32.totalorder %s10, 0
      %p72 = por %p70, %p71
      %p73 = scmp.ne.s32.totalorder %s62, %s65
      %p74 = scmp.eq.s32.totalorder %s15, 1
      %p75 = por %p73, %p74
      %p76 = scmp.ne.s32.totalorder %s65, %s66
      %p77 = scmp.eq.s32.totalorder %s15, 0
      %p78 = por %p76, %p77
      %p79 = scmp.ne.s32.totalorder %s65, %s66
      %p80 = scmp.eq.s32.totalorder %s16, 1
      %p81 = por %p79, %p80
      %p83 = scmp.ne.s32.totalorder %s66, %s82
      %p84 = scmp.eq.s32.totalorder %s16, 0
      %p85 = por %p83, %p84
      %s86 = ssub.s32 %s10, %s17
      %p87 = scmp.eq.s32.totalorder %s86, 0
      %s89 = sadd.s32 %s88, 1
      %s90 = scalar_select %p87, %s88, %s89
      %p93 = pneg %p87
      %p94 = scmp.eq.s32.totalorder %s10, 1
      %p95 = por %p93, %p94
      %p96 = scmp.ne.s32.totalorder %s88, %s91
      %p97 = scmp.eq.s32.totalorder %s10, 0
      %p98 = por %p96, %p97
      %p99 = scmp.ne.s32.totalorder %s88, %s91
      %p100 = scmp.eq.s32.totalorder %s15, 1
      %p101 = por %p99, %p100
      %p102 = scmp.ne.s32.totalorder %s91, %s92
      %p103 = scmp.eq.s32.totalorder %s15, 0
      %p104 = por %p102, %p103
      %p105 = scmp.ne.s32.totalorder %s91, %s92
      %p106 = scmp.eq.s32.totalorder %s16, 1
      %p107 = por %p105, %p106
      %p109 = scmp.ne.s32.totalorder %s92, %s108
      %p110 = scmp.eq.s32.totalorder %s16, 0
      %p111 = por %p109, %p110
      %p112 = scmp.le.s32.totalorder 1, %s10
      %p113 = scmp.lt.s32.totalorder %s10, 3
      %p114 = pnand %p112, %p113
      %p115 = pneg %p114
      // Predicated region
      $region9: #{qac_critic_forward.1} parent=5 // pred_check
        _
      $region10: #{qac_critic_forward.1} parent=5 // pred_check_branch
        %117 = sbr.rel (%p114) target = $region12
      $region11: #{qac_critic_forward.1} parent=5 // pred_region
        %s118 = ssub.s32 %s10, 1
        // Predicated region
        $region13: #{qac_critic_forward.1} parent=11 // pred_check
          %p119 = pneg %p31
        $region14: #{qac_critic_forward.1} parent=11 // pred_check_branch
          %121 = sbr.rel (%p119) target = $region16
        $region15: #{qac_critic_forward.1} parent=11 // pred_region
          %123 = vsyncadd [#allocation3], 0
          %s124 = sshll.u32 %s0, 4
          %s125 = int_to_ptr.hbm [resolvable:$true] %s124
          %s126 = sshll.u32 [#allocation2], 4
          %s127 = int_to_ptr.vmem [resolvable:$true] %s126
          %132 = dma.hbm_to_vmem [thread:$0]  %s125, 2176, %s127, [#allocation3], 128, 128, 8
        $region16: #{qac_critic_forward.1} parent=11 // pred_fallthru
          _
        // Predicated region
        $region17: #{qac_critic_forward.1} parent=11 // pred_check
          %p133 = pneg %p52
        $region18: #{qac_critic_forward.1} parent=11 // pred_check_branch
          %135 = sbr.rel (%p133) target = $region20
        $region19: #{qac_critic_forward.1} parent=11 // pred_region
          _
        $region20: #{qac_critic_forward.1} parent=11 // pred_fallthru
          _
      $region12: #{qac_critic_forward.1} parent=5 // pred_fallthru
        _
      %p136 = scmp.lt.s32.totalorder %s10, 2
      // Predicated region
      $region21: #{qac_critic_forward.1} parent=5 // pred_check
        %p137 = pneg %p136
      $region22: #{qac_critic_forward.1} parent=5 // pred_check_branch
        %139 = sbr.rel (%p137) target = $region24
      $region23: #{qac_critic_forward.1} parent=5 // pred_region
        // Predicated region
        $region25: #{qac_critic_forward.1} parent=23 // pred_check
          %p140 = pneg %p72
        $region26: #{qac_critic_forward.1} parent=23 // pred_check_branch
          %142 = sbr.rel (%p140) target = $region28
        $region27: #{qac_critic_forward.1} parent=23 // pred_region
          %p143 = scmp.lt.s32.totalorder %s10, 1
          %s144 = scalar_select %p143, %s10, 1
          %s145 = smul.addr %s144, 8
          %s146 = scalar_lea.vmem %s2, %s145
        $region28: #{qac_critic_forward.1} parent=23 // pred_fallthru
          _
      $region24: #{qac_critic_forward.1} parent=5 // pred_fallthru
        _
      %p147 = scmp.le.s32.totalorder 1, %s10
      %p148 = scmp.lt.s32.totalorder %s10, 3
      %p149 = pnand %p147, %p148
      %p150 = pneg %p149
      // Predicated region
      $region29: #{qac_critic_forward.1} parent=5 // pred_check
        _
      $region30: #{qac_critic_forward.1} parent=5 // pred_check_branch
        %152 = sbr.rel (%p149) target = $region32
      $region31: #{qac_critic_forward.1} parent=5 // pred_region
        %s153 = ssub.s32 %s10, 1
        // Predicated region
        $region33: #{qac_critic_forward.1} parent=31 // pred_check
          %p154 = pneg %p31
        $region34: #{qac_critic_forward.1} parent=31 // pred_check_branch
          %156 = sbr.rel (%p154) target = $region36
        $region35: #{qac_critic_forward.1} parent=31 // pred_region
          %158 = dma.done [#allocation3], 2176
        $region36: #{qac_critic_forward.1} parent=31 // pred_fallthru
          _
        %p159 = pneg %p31
        %p160 = pneg %p28
        %p161 = pneg %p52
        %p162 = pneg %p49
        %p163 = scmp.lt.s32.totalorder %s15, 1
        %s164 = scalar_select %p163, %s15, 1
        %s165 = smul.addr %s164, 8
        %s166 = scalar_lea.vmem %s2, %s165
        %p167 = pneg %p78
        %p168 = pneg %p75
        %p169 = pneg %p104
        %p170 = pneg %p101
        %p171 = scmp.lt.s32.totalorder %s15, 1
        %s172 = scalar_select %p171, %s15, 1
        %s173 = smul.addr %s172, 2
        %s174 = scalar_lea.vmem %s3, %s173
        %p175 = scmp.lt.s32.totalorder %s15, 1
        %s176 = scalar_select %p175, %s15, 1
        %s177 = smul.addr %s176, 8
        %s178 = scalar_lea.vmem %s2, %s177
        %p179 = scmp.lt.s32.totalorder %s15, 1
        %s180 = scalar_select %p179, %s15, 1
        %s181 = smul.addr %s180, 2
        %s182 = scalar_lea.vmem %s3, %s181
        %v183 = vld [vmem:[%s178] sm:$0xff]
        %v184 = vld [vmem:[%s1] sm:$0xff]
        %186 = vset.pattern.permute.xlu0 0
        %187 = vperm.xlu0 %186, %v184
        %v188 = vpop.permute.xlu0 %187
        %v190 = vmul.f32 %v183, %v188
        %v191 = vld [vmem:[#allocation2] sm:$0xff]
        %v192 = vld [vmem:[#allocation2 + $0x8] sm:$0xff]
        %v193 = vld [vmem:[#allocation2 + $0x10] sm:$0xff]
        %v194 = vld [vmem:[#allocation2 + $0x18] sm:$0xff]
        %196 = vset.pattern.permute.xlu0 0
        %197 = vperm.xlu0 %196, %v191
        %v198 = vpop.permute.xlu0 %197
        %201 = vset.pattern.permute.xlu0 0
        %202 = vperm.xlu0 %201, %v192
        %v203 = vpop.permute.xlu0 %202
        %206 = vset.pattern.permute.xlu0 0
        %207 = vperm.xlu0 %206, %v193
        %v208 = vpop.permute.xlu0 %207
        %211 = vset.pattern.permute.xlu0 0
        %212 = vperm.xlu0 %211, %v194
        %v213 = vpop.permute.xlu0 %212
        %v215 = vperm.slane %v190, 0
        %v216 = vmul.f32 %v198, %v215
        %v217 = vmul.f32 %v203, %v215
        %v218 = vmul.f32 %v208, %v215
        %v219 = vmul.f32 %v213, %v215
        %220 = vset.pattern.permute.xlu0 8
        %221 = vperm.xlu0 %220, %v191
        %v222 = vpop.permute.xlu0 %221
        %224 = vset.pattern.permute.xlu0 8
        %225 = vperm.xlu0 %224, %v192
        %v226 = vpop.permute.xlu0 %225
        %228 = vset.pattern.permute.xlu0 8
        %229 = vperm.xlu0 %228, %v193
        %v230 = vpop.permute.xlu0 %229
        %232 = vset.pattern.permute.xlu0 8
        %233 = vperm.xlu0 %232, %v194
        %v234 = vpop.permute.xlu0 %233
        %v236 = vadd.f32 %v222, %v216
        %v237 = vadd.f32 %v226, %v217
        %v238 = vadd.f32 %v230, %v218
        %v239 = vadd.f32 %v234, %v219
        %240 = vset.pattern.permute.xlu0 1
        %241 = vperm.xlu0 %240, %v191
        %v242 = vpop.permute.xlu0 %241
        %244 = vset.pattern.permute.xlu0 1
        %245 = vperm.xlu0 %244, %v192
        %v246 = vpop.permute.xlu0 %245
        %248 = vset.pattern.permute.xlu0 1
        %249 = vperm.xlu0 %248, %v193
        %v250 = vpop.permute.xlu0 %249
        %252 = vset.pattern.permute.xlu0 1
        %253 = vperm.xlu0 %252, %v194
        %v254 = vpop.permute.xlu0 %253
        %v256 = vperm.slane %v190, 1
        %v257 = vmul.f32 %v242, %v256
        %v258 = vmul.f32 %v246, %v256
        %v259 = vmul.f32 %v250, %v256
        %v260 = vmul.f32 %v254, %v256
        %v261 = vadd.f32 %v236, %v257
        %v262 = vadd.f32 %v237, %v258
        %v263 = vadd.f32 %v238, %v259
        %v264 = vadd.f32 %v239, %v260
        %265 = vset.pattern.permute.xlu0 2
        %266 = vperm.xlu0 %265, %v191
        %v267 = vpop.permute.xlu0 %266
        %269 = vset.pattern.permute.xlu0 2
        %270 = vperm.xlu0 %269, %v192
        %v271 = vpop.permute.xlu0 %270
        %273 = vset.pattern.permute.xlu0 2
        %274 = vperm.xlu0 %273, %v193
        %v275 = vpop.permute.xlu0 %274
        %277 = vset.pattern.permute.xlu0 2
        %278 = vperm.xlu0 %277, %v194
        %v279 = vpop.permute.xlu0 %278
        %v281 = vperm.slane %v190, 2
        %v282 = vmul.f32 %v267, %v281
        %v283 = vmul.f32 %v271, %v281
        %v284 = vmul.f32 %v275, %v281
        %v285 = vmul.f32 %v279, %v281
        %v286 = vadd.f32 %v261, %v282
        %v287 = vadd.f32 %v262, %v283
        %v288 = vadd.f32 %v263, %v284
        %v289 = vadd.f32 %v264, %v285
        %290 = vset.pattern.permute.xlu0 3
        %291 = vperm.xlu0 %290, %v191
        %v292 = vpop.permute.xlu0 %291
        %294 = vset.pattern.permute.xlu0 3
        %295 = vperm.xlu0 %294, %v192
        %v296 = vpop.permute.xlu0 %295
        %298 = vset.pattern.permute.xlu0 3
        %299 = vperm.xlu0 %298, %v193
        %v300 = vpop.permute.xlu0 %299
        %302 = vset.pattern.permute.xlu0 3
        %303 = vperm.xlu0 %302, %v194
        %v304 = vpop.permute.xlu0 %303
        %v306 = vperm.slane %v190, 3
        %v307 = vmul.f32 %v292, %v306
        %v308 = vmul.f32 %v296, %v306
        %v309 = vmul.f32 %v300, %v306
        %v310 = vmul.f32 %v304, %v306
        %v311 = vadd.f32 %v286, %v307
        %v312 = vadd.f32 %v287, %v308
        %v313 = vadd.f32 %v288, %v309
        %v314 = vadd.f32 %v289, %v310
        %v315 = vmax.f32 %v311, 0.0
        %v316 = vmax.f32 %v312, 0.0
        %v317 = vmax.f32 %v313, 0.0
        %v318 = vmax.f32 %v314, 0.0
        %v319 = vld [vmem:[#allocation2 + $0x20] sm:$0xff]
        %v320 = vld [vmem:[#allocation2 + $0x28] sm:$0xff]
        %v321 = vld [vmem:[#allocation2 + $0x30] sm:$0xff]
        %v322 = vld [vmem:[#allocation2 + $0x38] sm:$0xff]
        %v323 = vld [vmem:[#allocation2 + $0x40] sm:$0xff]
        %v324 = vld [vmem:[#allocation2 + $0x48] sm:$0xff]
        %v325 = vld [vmem:[#allocation2 + $0x50] sm:$0xff]
        %v326 = vld [vmem:[#allocation2 + $0x58] sm:$0xff]
        %328 = vset.pattern.permute.xlu0 32
        %329 = vperm.xlu0 %328, %v319
        %v330 = vpop.permute.xlu0 %329
        %333 = vset.pattern.permute.xlu0 32
        %334 = vperm.xlu0 %333, %v320
        %v335 = vpop.permute.xlu0 %334
        %338 = vset.pattern.permute.xlu0 32
        %339 = vperm.xlu0 %338, %v321
        %v340 = vpop.permute.xlu0 %339
        %343 = vset.pattern.permute.xlu0 32
        %344 = vperm.xlu0 %343, %v322
        %v345 = vpop.permute.xlu0 %344
        %348 = vset.pattern.permute.xlu0 32
        %349 = vperm.xlu0 %348, %v323
        %v350 = vpop.permute.xlu0 %349
        %353 = vset.pattern.permute.xlu0 32
        %354 = vperm.xlu0 %353, %v324
        %v355 = vpop.permute.xlu0 %354
        %358 = vset.pattern.permute.xlu0 32
        %359 = vperm.xlu0 %358, %v325
        %v360 = vpop.permute.xlu0 %359
        %363 = vset.pattern.permute.xlu0 32
        %364 = vperm.xlu0 %363, %v326
        %v365 = vpop.permute.xlu0 %364
        %vm367 = vcmask 261120
        %v368 = vsel %vm367, %v319, 0
        %v370 = vsel %vm367, %v320, 0
        %v372 = vsel %vm367, %v321, 0
        %v374 = vsel %vm367, %v322, 0
        %v376 = vsel %vm367, %v323, 0
        %v378 = vsel %vm367, %v324, 0
        %v380 = vsel %vm367, %v325, 0
        %v382 = vsel %vm367, %v326, 0
        %384 = vmatpush.msra.mxu0 0.0
        %385 = vmatpush.msra.mxu0 0.0
        %386 = vmatpush.msra.mxu0 0.0
        %387 = vmatpush.msra.mxu0 0.0
        %388 = vmatpush.msra.mxu0 0.0
        %389 = vmatpush.msra.mxu0 0.0
        %390 = vmatpush.msra.mxu0 0.0
        %391 = vmatpush.msra.mxu0 0.0
        %392 = vmatpush.msra.mxu0 0.0
        %393 = vmatpush.msra.mxu0 0.0
        %394 = vmatpush.msra.mxu0 0.0
        %395 = vmatpush.msra.mxu0 0.0
        %396 = vmatpush.msra.mxu0 %v318
        %397 = vmatpush.msra.mxu0 %v317
        %398 = vmatpush.msra.mxu0 %v316
        %399 = vmatpush.msra.mxu0 %v315
        %400 = vmatmul.f32.gmra.mxu0 %v368
        %v401 = vpop.f32.mrf.mxu0
        %v402 = vadd.f32 %v330, %v401
        %403 = vmatmul.f32.gmra.mxu0 %v370
        %v404 = vpop.f32.mrf.mxu0
        %v405 = vadd.f32 %v335, %v404
        %406 = vmatmul.f32.gmra.mxu0 %v372
        %v407 = vpop.f32.mrf.mxu0
        %v408 = vadd.f32 %v340, %v407
        %409 = vmatmul.f32.gmra.mxu0 %v374
        %v410 = vpop.f32.mrf.mxu0
        %v411 = vadd.f32 %v345, %v410
        %412 = vmatmul.f32.gmra.mxu0 %v376
        %v413 = vpop.f32.mrf.mxu0
        %v414 = vadd.f32 %v350, %v413
        %415 = vmatmul.f32.gmra.mxu0 %v378
        %v416 = vpop.f32.mrf.mxu0
        %v417 = vadd.f32 %v355, %v416
        %418 = vmatmul.f32.gmra.mxu0 %v380
        %v419 = vpop.f32.mrf.mxu0
        %v420 = vadd.f32 %v360, %v419
        %421 = vmatmul.f32.gmra.mxu0 %v382
        %v422 = vpop.f32.mrf.mxu0
        %v423 = vadd.f32 %v365, %v422
        %424 = vdwg.mxu0
        %v425 = vmax.f32 %v402, 0.0
        %v426 = vmax.f32 %v405, 0.0
        %v427 = vmax.f32 %v408, 0.0
        %v428 = vmax.f32 %v411, 0.0
        %v429 = vmax.f32 %v414, 0.0
        %v430 = vmax.f32 %v417, 0.0
        %v431 = vmax.f32 %v420, 0.0
        %v432 = vmax.f32 %v423, 0.0
        %v433 = vld [vmem:[#allocation2 + $0x60] sm:$0xff]
        %v434 = vld [vmem:[#allocation2 + $0x68] sm:$0xff]
        %v435 = vld [vmem:[#allocation2 + $0x70] sm:$0xff]
        %v436 = vld [vmem:[#allocation2 + $0x78] sm:$0xff]
        %438 = vset.pattern.permute.xlu0 64
        %439 = vperm.xlu0 %438, %v433
        %v440 = vpop.permute.xlu0 %439
        %443 = vset.pattern.permute.xlu0 64
        %444 = vperm.xlu0 %443, %v434
        %v445 = vpop.permute.xlu0 %444
        %448 = vset.pattern.permute.xlu0 64
        %449 = vperm.xlu0 %448, %v435
        %v450 = vpop.permute.xlu0 %449
        %453 = vset.pattern.permute.xlu0 64
        %454 = vperm.xlu0 %453, %v436
        %v455 = vpop.permute.xlu0 %454
        %vm457 = vcmask 523264
        %v458 = vsel %vm457, %v433, 0
        %v460 = vsel %vm457, %v434, 0
        %v462 = vsel %vm457, %v435, 0
        %v464 = vsel %vm457, %v436, 0
        %466 = vmatpush.msra.mxu0 0.0
        %467 = vmatpush.msra.mxu0 0.0
        %468 = vmatpush.msra.mxu0 0.0
        %469 = vmatpush.msra.mxu0 0.0
        %470 = vmatpush.msra.mxu0 0.0
        %471 = vmatpush.msra.mxu0 0.0
        %472 = vmatpush.msra.mxu0 0.0
        %473 = vmatpush.msra.mxu0 0.0
        %474 = vmatpush.msra.mxu0 %v432
        %475 = vmatpush.msra.mxu0 %v431
        %476 = vmatpush.msra.mxu0 %v430
        %477 = vmatpush.msra.mxu0 %v429
        %478 = vmatpush.msra.mxu0 %v428
        %479 = vmatpush.msra.mxu0 %v427
        %480 = vmatpush.msra.mxu0 %v426
        %481 = vmatpush.msra.mxu0 %v425
        %482 = vmatmul.f32.gmra.mxu0 %v458
        %v483 = vpop.f32.mrf.mxu0
        %v484 = vadd.f32 %v440, %v483
        %485 = vmatmul.f32.gmra.mxu0 %v460
        %v486 = vpop.f32.mrf.mxu0
        %v487 = vadd.f32 %v445, %v486
        %488 = vmatmul.f32.gmra.mxu0 %v462
        %v489 = vpop.f32.mrf.mxu0
        %v490 = vadd.f32 %v450, %v489
        %491 = vmatmul.f32.gmra.mxu0 %v464
        %v492 = vpop.f32.mrf.mxu0
        %v493 = vadd.f32 %v455, %v492
        %494 = vdwg.mxu0
        %v495 = vmax.f32 %v484, 0.0
        %v496 = vmax.f32 %v487, 0.0
        %v497 = vmax.f32 %v490, 0.0
        %v498 = vmax.f32 %v493, 0.0
        %v499 = vld [vmem:[#allocation2 + $0x80] sm:$0xff]
        %501 = vset.pattern.permute.xlu0 32
        %502 = vperm.xlu0 %501, %v499
        %v503 = vpop.permute.xlu0 %502
        %v505 = vsel %vm367, %v499, 0
        %507 = vmatpush.msra.mxu0 0.0
        %508 = vmatpush.msra.mxu0 0.0
        %509 = vmatpush.msra.mxu0 0.0
        %510 = vmatpush.msra.mxu0 0.0
        %511 = vmatpush.msra.mxu0 0.0
        %512 = vmatpush.msra.mxu0 0.0
        %513 = vmatpush.msra.mxu0 0.0
        %514 = vmatpush.msra.mxu0 0.0
        %515 = vmatpush.msra.mxu0 0.0
        %516 = vmatpush.msra.mxu0 0.0
        %517 = vmatpush.msra.mxu0 0.0
        %518 = vmatpush.msra.mxu0 0.0
        %519 = vmatpush.msra.mxu0 %v498
        %520 = vmatpush.msra.mxu0 %v497
        %521 = vmatpush.msra.mxu0 %v496
        %522 = vmatpush.msra.mxu0 %v495
        %523 = vmatmul.f32.gmra.mxu0 %v505
        %v524 = vpop.f32.mrf.mxu0
        %v525 = vadd.f32 %v503, %v524
        %526 = vdwg.mxu0
        %v527 = vtanh.pop %v525
        %528 = vst [vmem:[%s182] sm:$0x3] %v527
        %p529 = scmp.lt.s32.totalorder %s15, 1
        %s530 = scalar_select %p529, %s15, 1
        %s531 = smul.addr %s530, 2
        %s532 = scalar_lea.vmem %s3, %s531
        // Predicated region
        $region37: #{qac_critic_forward.1} parent=31 // pred_check
          %p533 = pneg %p101
        $region38: #{qac_critic_forward.1} parent=31 // pred_check_branch
          %535 = sbr.rel (%p533) target = $region40
        $region39: #{qac_critic_forward.1} parent=31 // pred_region
          _
        $region40: #{qac_critic_forward.1} parent=31 // pred_fallthru
          _
      $region32: #{qac_critic_forward.1} parent=5 // pred_fallthru
        _
      %p536 = scmp.le.s32.totalorder 2, %s10
      // Predicated region
      $region41: #{qac_critic_forward.1} parent=5 // pred_check
        %p537 = pneg %p536
      $region42: #{qac_critic_forward.1} parent=5 // pred_check_branch
        %539 = sbr.rel (%p537) target = $region44
      $region43: #{qac_critic_forward.1} parent=5 // pred_region
        %s540 = ssub.s32 %s10, 2
        // Predicated region
        $region45: #{qac_critic_forward.1} parent=43 // pred_check
          %p541 = pneg %p107
        $region46: #{qac_critic_forward.1} parent=43 // pred_check_branch
          %543 = sbr.rel (%p541) target = $region48
        $region47: #{qac_critic_forward.1} parent=43 // pred_region
          %p544 = scmp.lt.s32.totalorder %s16, 1
          %s545 = scalar_select %p544, %s16, 1
          %s546 = smul.addr %s545, 2
          %s547 = scalar_lea.vmem %s3, %s546
        $region48: #{qac_critic_forward.1} parent=43 // pred_fallthru
          _
      $region44: #{qac_critic_forward.1} parent=5 // pred_fallthru
        _
    $region6: #{qac_critic_forward.1} parent=1 // loop_footer
      %s14 = sadd.s32 1, %s10
    $region7: #{qac_critic_forward.1} parent=1 // loop_footer_branch
      %9 = sbr.rel target = $region3
    $region8: #{qac_critic_forward.1} parent=1 // loop_exit
      _
    %548 = vsyncpa [#allocation3], 1
    %s549 = scalar_lea.sflag [#allocation3], 1
    %550 = vsyncpa %s549, 1

</llo_original>
